<compile_context>
chip_gen: v7x
topology: tpu7x:2x2x1
jax: 0.10.0
libtpu: 0.0.40
codegen_flags: <defaults>
</compile_context>

<pallas_src>
import functools

import jax
import jax.numpy as jnp
from jax import lax
from jax.experimental import pallas as pl
from jax.experimental.pallas import tpu as pltpu


# --------------------------------------------------------------------------- #
# tile sizing (bytes-based, generation-safe)                                   #
# --------------------------------------------------------------------------- #
def _pick_batch_tile(batch, feat_dim, target_bytes=4 << 20):
    """Biggest multiple-of-8 row count whose f32 tile is ~target_bytes (so the
    double-buffered h stream + the elementwise accumulator stay well under the
    32 MiB scoped-VMEM default on v5e/v6e/v7x), or the full batch if smaller."""
    rows = max(8, (target_bytes // (4 * feat_dim)) // 8 * 8)
    return batch if batch <= rows else int(rows)


def _pick_center_tile(num_classes, feat_dim, target_bytes=2 << 20):
    """Inter tile over classes: full table if it is small; otherwise a multiple of
    128 (keeps the (1, tc) norm-row block legal) sized by bytes and capped at 512
    so the (tc, tc) gram / dist / accumulator intermediates stay ~1 MiB."""
    if num_classes <= 512:
        return num_classes
    rows = (target_bytes // (4 * feat_dim)) // 128 * 128
    return int(min(512, max(128, rows)))


# --------------------------------------------------------------------------- #
# intra-center loss: alpha * mean((h - centers[label])^2), streamed over batch #
# --------------------------------------------------------------------------- #
def _intra_kernel(h_ref, crow_ref, out_ref, acc_ref, *, batch, tile_b, scale):
    step = pl.program_id(0)
    last = pl.num_programs(0) - 1

    @pl.when(step == 0)
    def _init():
        acc_ref[...] = jnp.zeros_like(acc_ref)

    diff = h_ref[...] - crow_ref[...]            # (TB, D) - resident (1, D) row
    sq = diff * diff

    if batch % tile_b != 0:
        # Only the final (partial) tile needs a row mask; interior tiles skip it.
        @pl.when(step != last)
        def _full():
            acc_ref[...] += sq

        @pl.when(step == last)
        def _edge():
            row = lax.broadcasted_iota(jnp.int32, (tile_b, 1), 0)
            acc_ref[...] += jnp.where(row < batch - step * tile_b, sq, 0.0)
    else:
        acc_ref[...] += sq

    @pl.when(step == last)
    def _fin():
        # scale = alpha / (B*D): folded compile-time constant; single reduce here.
        out_ref[0, 0] = scale * jnp.sum(acc_ref[...])


# --------------------------------------------------------------------------- #
# inter-center loss: -(1-alpha) * sum_{a!=b} ||c_a - c_b|| / (C*(C-1))         #
# triangular grid over upper (i <= j) center-tile pairs                        #
# --------------------------------------------------------------------------- #
def _inter_kernel(ti_ref, tj_ref, ci_ref, cj_ref, sqi_ref, sqj_ref, out_ref,
                  acc_ref, *, num_classes, tile_c, num_pairs, scale):
    p = pl.program_id(0)
    i = ti_ref[p]                                # row-tile index (SMEM lookup)
    j = tj_ref[p]                                # col-tile index (SMEM lookup)

    @pl.when(p == 0)
    def _init():
        acc_ref[...] = jnp.zeros_like(acc_ref)

    ci = ci_ref[...]                             # (TC, D) row tile
    cj = cj_ref[...]                             # (TC, D) col tile
    # A . B^T with both operands contracted on their last (lane) dim:
    # layout-native MXU gram, no transpose/relayout of the centers tiles.
    gram = lax.dot_general(
        ci, cj, dimension_numbers=(((1,), (1,)), ((), ())),
        preferred_element_type=jnp.float32)      # (TC, TC)
    # ||c||^2 rows/cols precomputed in the wrapper -> no in-kernel XLU transpose.
    d2 = jnp.maximum(sqi_ref[...] + sqj_ref[...] - 2.0 * gram, 0.0)
    dist = jnp.sqrt(d2)

    if num_classes % tile_c != 0:
        # Edge tiles exist; combine padding + exact-zero diagonal in one mask.
        row = lax.broadcasted_iota(jnp.int32, (tile_c, tile_c), 0) + i * tile_c
        col = lax.broadcasted_iota(jnp.int32, (tile_c, tile_c), 1) + j * tile_c
        mask = (row != col) & (row < num_classes) & (col < num_classes)
        # lower-triangle tile pairs are never visited -> count j > i tiles twice
        factor = jnp.where(j > i, 2.0, 1.0).astype(jnp.float32)
        acc_ref[...] += factor * jnp.where(mask, dist, 0.0)
    else:
        @pl.when(i == j)
        def _diag():                             # exact-zero diagonal, counted once
            row = lax.broadcasted_iota(jnp.int32, (tile_c, tile_c), 0)
            col = lax.broadcasted_iota(jnp.int32, (tile_c, tile_c), 1)
            acc_ref[...] += jnp.where(row != col, dist, 0.0)

        @pl.when(i != j)
        def _off():                              # unmasked; mirror tile skipped -> x2
            acc_ref[...] += 2.0 * dist

    @pl.when(p == num_pairs - 1)
    def _fin():
        # scale = -(1-alpha) / (C*(C-1)): folded compile-time constant.
        out_ref[0, 0] = scale * jnp.sum(acc_ref[...])


# --------------------------------------------------------------------------- #
# wrapper                                                                      #
# --------------------------------------------------------------------------- #
def center_loss(h, centers, label, alpha=0.5):
    """Pallas TPU implementation of CenterLoss.forward(h, label)."""
    h = jnp.asarray(h, jnp.float32)
    centers = jnp.asarray(centers, jnp.float32)
    B, D = h.shape
    C, D2 = centers.shape
    assert D == D2, "feature dims of h and centers must match"

    # Labelled center row gathered ONCE in the wrapper (free 1-row slice in XLA);
    # passed as a standalone (1, D) array whose full-shape block stays VMEM-resident.
    c_row = lax.dynamic_slice_in_dim(centers, jnp.asarray(label, jnp.int32), 1, axis=0)

    # ---------------- intra term (streamed over batch tiles) ----------------
    tb = _pick_batch_tile(B, D)
    nb = -(-B // tb)
    intra_scale = float(alpha) / float(B * D)
    intra = pl.pallas_call(
        functools.partial(_intra_kernel, batch=B, tile_b=tb, scale=intra_scale),
        out_shape=jax.ShapeDtypeStruct((1, 1), jnp.float32),
        grid_spec=pltpu.PrefetchScalarGridSpec(
            num_scalar_prefetch=0,
            grid=(nb,),
            in_specs=[
                pl.BlockSpec((tb, D), lambda i: (i, 0)),    # streamed h tile
                pl.BlockSpec((1, D), lambda i: (0, 0)),     # resident center row
            ],
            out_specs=pl.BlockSpec(memory_space=pltpu.SMEM),  # scalar result
            scratch_shapes=[pltpu.VMEM((tb, D), jnp.float32)],
        ),
        compiler_params=pltpu.CompilerParams(
            dimension_semantics=("arbitrary",)),            # resident accumulator
    )(h, c_row)
    loss = intra[0, 0]

    # ---------------- inter term (triangular tiled pairwise distances) ------
    if C >= 2:  # guard: C == 1 would divide by zero (reference would NaN)
        tc = _pick_center_tile(C, D)
        nc = -(-C // tc)
        pairs = [(i, j) for i in range(nc) for j in range(i, nc)]
        ti = jnp.asarray([p[0] for p in pairs], jnp.int32)
        tj = jnp.asarray([p[1] for p in pairs], jnp.int32)
        sq = jnp.sum(centers * centers, axis=-1)            # ||c||^2 once, in XLA
        sq_col = sq[:, None]                                # (C, 1) row-tile norms
        sq_row = sq[None, :]                                # (1, C) col-tile norms
        inter_scale = -(1.0 - float(alpha)) / float(C * (C - 1))
        inter = pl.pallas_call(
            functools.partial(_inter_kernel, num_classes=C, tile_c=tc,
                              num_pairs=len(pairs), scale=inter_scale),
            out_shape=jax.ShapeDtypeStruct((1, 1), jnp.float32),
            grid_spec=pltpu.PrefetchScalarGridSpec(
                num_scalar_prefetch=2,                      # (i, j) lookup tables
                grid=(len(pairs),),
                in_specs=[
                    pl.BlockSpec((tc, D), lambda p, ti_r, tj_r: (ti_r[p], 0)),
                    pl.BlockSpec((tc, D), lambda p, ti_r, tj_r: (tj_r[p], 0)),
                    pl.BlockSpec((tc, 1), lambda p, ti_r, tj_r: (ti_r[p], 0)),
                    pl.BlockSpec((1, tc), lambda p, ti_r, tj_r: (0, tj_r[p])),
                ],
                out_specs=pl.BlockSpec(memory_space=pltpu.SMEM),
                scratch_shapes=[pltpu.VMEM((tc, tc), jnp.float32)],
            ),
            compiler_params=pltpu.CompilerParams(
                dimension_semantics=("arbitrary",)),
        )(ti, tj, centers, centers, sq_col, sq_row)
        loss = loss + inter[0, 0]

    return loss


def center_loss_ref(h, centers, label, alpha=0.5):
    """Pure-JAX reference mirroring the PyTorch forward."""
    cb = centers[label][None, :]
    intra = jnp.mean((h - cb) ** 2)
    d2 = jnp.sum((centers[:, None, :] - centers[None, :, :]) ** 2, axis=-1)
    dist = jnp.sqrt(jnp.maximum(d2, 0.0))
    nc = centers.shape[0]
    dist = dist * (1.0 - jnp.eye(nc, dtype=dist.dtype))
    inter = -jnp.sum(dist) / (nc * (nc - 1))
    return alpha * intra + (1.0 - alpha) * inter


if __name__ == "__main__":
    keys = jax.random.split(jax.random.PRNGKey(0), 6)

    # case 1: tiny shapes matching the module's typical use
    num_classes, feat_dim, batch, label, alpha = 4, 32, 8, 2, 0.5
    h = jax.random.normal(keys[0], (batch, feat_dim), dtype=jnp.float32)
    centers = jax.random.normal(keys[1], (num_classes, feat_dim), dtype=jnp.float32)
    out = jax.block_until_ready(center_loss(h, centers, label, alpha))
    ref = center_loss_ref(h, centers, label, alpha)
    assert jnp.allclose(out, ref, rtol=1e-5, atol=2e-5), (out, ref)

    # case 2: odd, non-aligned small shapes + different alpha / label
    num_classes, feat_dim, batch, label, alpha = 5, 64, 16, 4, 0.3
    h2 = jax.random.normal(keys[2], (batch, feat_dim), dtype=jnp.float32)
    centers2 = jax.random.normal(keys[3], (num_classes, feat_dim), dtype=jnp.float32)
    out2 = jax.block_until_ready(center_loss(h2, centers2, label, alpha))
    ref2 = center_loss_ref(h2, centers2, label, alpha)
    assert jnp.allclose(out2, ref2, rtol=1e-5, atol=2e-5), (out2, ref2)

    # case 3: exercises the multi-pair triangular inter grid (nc > 1),
    # dynamic (i, j) lookup tables and padded edge tiles.
    num_classes, feat_dim, batch, label, alpha = 640, 64, 16, 7, 0.4
    h3 = jax.random.normal(keys[4], (batch, feat_dim), dtype=jnp.float32)
    centers3 = jax.random.normal(keys[5], (num_classes, feat_dim), dtype=jnp.float32)
    out3 = jax.block_until_ready(center_loss(h3, centers3, label, alpha))
    ref3 = center_loss_ref(h3, centers3, label, alpha)
    assert jnp.allclose(out3, ref3, rtol=1e-4, atol=1e-4), (out3, ref3)

    print("KERNEL_OK")
</pallas_src>

<mosaic_0001>
module attributes {stable_mosaic.version = 11 : i64} {
  func.func @_intra_kernel(%arg0: i32, %arg1: memref<8x32xf32, #tpu.memory_space<vmem>>, %arg2: memref<1x32xf32, #tpu.memory_space<vmem>>, %arg3: memref<1x1xf32, #tpu.memory_space<smem>>, %arg4: memref<8x32xf32, #tpu.memory_space<vmem>>) attributes {dimension_semantics = [#tpu.dimension_semantics<arbitrary>], iteration_bounds = array<i64: 1>, scalar_prefetch = 0 : i64, scratch_operands = 1 : i64, tpu.core_type = #tpu.core_type<tc>, window_params = [{transform_indices = @transform_0, window_bounds = array<i64: 8, 32>}, {pipeline_mode = #tpu.pipeline_mode<synchronous>, transform_indices = @transform_1, window_bounds = array<i64: 1, 32>}, {transform_indices = @transform_2, window_bounds = array<i64: 1, 1>}]} {
    %c0_i32 = arith.constant 0 : i32
    %0 = arith.cmpi eq, %arg0, %c0_i32 : i32
    %1 = arith.extui %0 : i1 to i32
    %c0_i32_0 = arith.constant 0 : i32
    %2 = arith.cmpi ne, %1, %c0_i32_0 : i32
    scf.if %2 {
      %cst = arith.constant 0.000000e+00 : f32
      %14 = vector.broadcast %cst : f32 to vector<8x32xf32>
      %c0_10 = arith.constant 0 : index
      %c0_11 = arith.constant 0 : index
      %15 = vector.load %arg4[%c0_10, %c0_11] : memref<8x32xf32, #tpu.memory_space<vmem>>, vector<8x32xf32>
      tpu.vector_store %arg4[%c0_10, %c0_11], %14 {strides = array<i32>} : memref<8x32xf32, #tpu.memory_space<vmem>>, vector<8x32xf32>,
    } else {
    }
    %c0 = arith.constant 0 : index
    %c0_1 = arith.constant 0 : index
    %3 = vector.load %arg1[%c0, %c0_1] : memref<8x32xf32, #tpu.memory_space<vmem>>, vector<8x32xf32>
    %c0_2 = arith.constant 0 : index
    %c0_3 = arith.constant 0 : index
    %4 = vector.load %arg2[%c0_2, %c0_3] : memref<1x32xf32, #tpu.memory_space<vmem>>, vector<1x32xf32>
    %5 = vector.broadcast %4 : vector<1x32xf32> to vector<8x32xf32>
    %6 = arith.subf %3, %5 : vector<8x32xf32>
    %7 = arith.mulf %6, %6 : vector<8x32xf32>
    %c0_4 = arith.constant 0 : index
    %c0_5 = arith.constant 0 : index
    %8 = vector.load %arg4[%c0_4, %c0_5] : memref<8x32xf32, #tpu.memory_space<vmem>>, vector<8x32xf32>
    %9 = arith.addf %8, %7 : vector<8x32xf32>
    %c0_6 = arith.constant 0 : index
    %c0_7 = arith.constant 0 : index
    %10 = vector.load %arg4[%c0_6, %c0_7] : memref<8x32xf32, #tpu.memory_space<vmem>>, vector<8x32xf32>
    tpu.vector_store %arg4[%c0_6, %c0_7], %9 {strides = array<i32>} : memref<8x32xf32, #tpu.memory_space<vmem>>, vector<8x32xf32>,
    %c0_i32_8 = arith.constant 0 : i32
    %11 = arith.cmpi eq, %arg0, %c0_i32_8 : i32
    %12 = arith.extui %11 : i1 to i32
    %c0_i32_9 = arith.constant 0 : i32
    %13 = arith.cmpi ne, %12, %c0_i32_9 : i32
    scf.if %13 {
      %c0_10 = arith.constant 0 : index
      %c0_11 = arith.constant 0 : index
      %14 = vector.load %arg4[%c0_10, %c0_11] : memref<8x32xf32, #tpu.memory_space<vmem>>, vector<8x32xf32>
      %15 = vector.shape_cast %14 : vector<8x32xf32> to vector<1x8x32xf32>
      %cst = arith.constant dense<0.000000e+00> : vector<1xf32>
      %16 = vector.multi_reduction <add>, %15, %cst [1, 2] : vector<1x8x32xf32> to vector<1xf32>
      %17 = vector.shape_cast %16 : vector<1xf32> to vector<1x1x1xf32>
      %18 = vector.extract %17[0, 0, 0] : f32 from vector<1x1x1xf32>
      %cst_12 = arith.constant 0.001953125 : f32
      %19 = arith.mulf %cst_12, %18 : f32
      %c0_13 = arith.constant 0 : index
      %c0_14 = arith.constant 0 : index
      %20 = memref.load %arg3[%c0_13, %c0_14] : memref<1x1xf32, #tpu.memory_space<smem>>
      memref.store %19, %arg3[%c0_13, %c0_14] : memref<1x1xf32, #tpu.memory_space<smem>>
    } else {
    }
    return
  }
  func.func @transform_0(%arg0: i32) -> (i32, i32) {
    %c0_i32 = arith.constant 0 : i32
    %c0_i32_0 = arith.constant 0 : i32
    return %arg0, %c0_i32 : i32, i32
  }
  func.func @transform_1(%arg0: i32) -> (i32, i32) {
    %c0_i32 = arith.constant 0 : i32
    %c0_i32_0 = arith.constant 0 : i32
    %c0_i32_1 = arith.constant 0 : i32
    return %c0_i32, %c0_i32_0 : i32, i32
  }
  func.func @transform_2(%arg0: i32) -> (i32, i32) {
    %c0_i32 = arith.constant 0 : i32
    %c0_i32_0 = arith.constant 0 : i32
    %c0_i32_1 = arith.constant 0 : i32
    return %c0_i32, %c0_i32_0 : i32, i32
  }
}

</mosaic_0001>

<llo_original>
// kernel: tpu_custom_call.1
$region0: #{tpu_custom_call.1}
  #allocation0 [shape = 'u32[]', space=smem, size = 0x4, offset = 0x4, fixed_abs, tag = 'smem constant byte address 0x4 - core index']
  #allocation1 [shape = 'u32[144,128]{1,0:T(1,128)}', space=vmem, size = 0x12000, scoped, tag = 'internal scratch']
  #allocation2 [shape = 'f32[8,32]{1,0:T(8,128)}', space=vmem, size = 0x1000, scoped, tag = 'scratch operand']
  %s0 = inlined_call_operand.hbm [shape: f32[8,32], index: 0, kind: input, shape index: {}]
  %s1 = inlined_call_operand.vmem [shape: f32[1,32], index: 1, kind: input, shape index: {}]
  %s2 = inlined_call_operand.hbm [shape: f32[1,1], index: 2, kind: output, shape index: {}]
  %s3 = sld [smem:[#allocation0]]
  $region30: #{tpu_custom_call.1} parent=0
    _
  %s5 = ssub.s32 1, %s3
  %s6 = scalar_select 0, %s5, %s3
  $region1: #{tpu_custom_call.1} parent=0
    #allocation3 [shape = 'u8[4096]{0}', space=vmem, size = 0x1000, scoped, tag = 'input window, operand 0, single buffered']
    #allocation4 [shape = 's32[1]{0}', space=sflag, size = 0x4, scoped, tag = 'scoped memory for tpu_custom_call.1']
    #allocation5 [shape = 's32[1]{0}', space=sflag, size = 0x4, scoped, tag = 'scoped memory for tpu_custom_call.1']
    #allocation6 [shape = 'u8[512]{0}', space=smem, size = 0x200, scoped, tag = 'output window, operand 0, single buffered']
    %7 = vsyncpa [#allocation4], 0
    %8 = vsyncpa [#allocation5], 0
    // Predicated region
    $region2: #{tpu_custom_call.1} parent=1 // pred_check
      _
    $region3: #{tpu_custom_call.1} parent=1 // pred_check_branch
      %10 = sbr.rel (0) target = $region5
    $region4: #{tpu_custom_call.1} parent=1 // pred_region
      %s12 = ssub.s32 128, 128
      %13 = vsyncadd [#allocation4], %s12
      %s15 = sshll.u32 [#allocation3], 4
      %s16 = int_to_ptr.vmem [resolvable:$true] %s15
      %18 = dma.hbm_to_vmem [thread:$0]  %s0, 128, %s16, [#allocation4]
    $region5: #{tpu_custom_call.1} parent=1 // pred_fallthru
      _
    // Predicated region
    $region6: #{tpu_custom_call.1} parent=1 // pred_check
      _
    $region7: #{tpu_custom_call.1} parent=1 // pred_check_branch
      %20 = sbr.rel (0) target = $region9
    $region8: #{tpu_custom_call.1} parent=1 // pred_region
      _
    $region9: #{tpu_custom_call.1} parent=1 // pred_fallthru
      _
    // Predicated region
    $region10: #{tpu_custom_call.1} parent=1 // pred_check
      _
    $region11: #{tpu_custom_call.1} parent=1 // pred_check_branch
      %22 = sbr.rel (0) target = $region13
    $region12: #{tpu_custom_call.1} parent=1 // pred_region
      %23 = dma.done [#allocation4], 128
    $region13: #{tpu_custom_call.1} parent=1 // pred_fallthru
      _
    %p24 = scmp.eq.s32.totalorder 0, 0
    // Predicated region
    $region14: #{tpu_custom_call.1} parent=1 // pred_check
      %p25 = pneg %p24
    $region15: #{tpu_custom_call.1} parent=1 // pred_check_branch
      %27 = sbr.rel (%p25) target = $region17
    $region16: #{tpu_custom_call.1} parent=1 // pred_region
      %vm28 = vcmask 261120
      %29 = vst.msk [vmem:[#allocation2] sm:$0xff] %vm28, 0.0
    $region17: #{tpu_custom_call.1} parent=1 // pred_fallthru
      _
    %v30 = vld [vmem:[#allocation3] sm:$0xff]
    %v31 = vld [vmem:[%s1] sm:$0x1]
    %v33 = vlaneseq
    %v34 = vshrl.u32 %v33, 7
    %v35 = vsub.s32 0, %v34
    %v36 = vrot.slane %v31, %v35
    %v38 = vsub.f32 %v30, %v36
    %v39 = vmul.f32 %v38, %v38
    %v40 = vld [vmem:[#allocation2] sm:$0xff]
    %v41 = vadd.f32 %v40, %v39
    %vm42 = vcmask 261120
    %43 = vst.msk [vmem:[#allocation2] sm:$0xff] %vm42, %v41
    // Predicated region
    $region18: #{tpu_custom_call.1} parent=1 // pred_check
      %p44 = pneg %p24
    $region19: #{tpu_custom_call.1} parent=1 // pred_check_branch
      %46 = sbr.rel (%p44) target = $region21
    $region20: #{tpu_custom_call.1} parent=1 // pred_region
      %v47 = vld [vmem:[#allocation2] sm:$0xff]
      %v48 = vsel %vm42, %v47, 0.0
      %49 = vadd.xlane.f32.xlu0 %v48
      %v50 = vpop.xlane.xlu0 %49
      %v51 = vrot.slane %v50, 4
      %v52 = vadd.f32 %v50, %v51
      %v53 = vrot.slane %v52, 2
      %v54 = vadd.f32 %v52, %v53
      %v55 = vrot.slane %v54, 1
      %v56 = vadd.f32 %v54, %v55
      %s57 = vtos %v56
      %s58 = smul.f32 %s57, 0.001953125
      %s59 = scalar_lea.smem [#allocation6], 0
      %60 = sst [smem:[%s59]] %s58
    $region21: #{tpu_custom_call.1} parent=1 // pred_fallthru
      _
    // Predicated region
    $region22: #{tpu_custom_call.1} parent=1 // pred_check
      _
    $region23: #{tpu_custom_call.1} parent=1 // pred_check_branch
      %62 = sbr.rel (0) target = $region25
    $region24: #{tpu_custom_call.1} parent=1 // pred_region
      %s64 = ssub.s32 16, 16
      %65 = vsyncadd [#allocation5], %s64
      %68 = dma.smem_to_hbm [#allocation6], 16, %s2, [#allocation5]
    $region25: #{tpu_custom_call.1} parent=1 // pred_fallthru
      _
    // Predicated region
    $region26: #{tpu_custom_call.1} parent=1 // pred_check
      _
    $region27: #{tpu_custom_call.1} parent=1 // pred_check_branch
      %70 = sbr.rel (0) target = $region29
    $region28: #{tpu_custom_call.1} parent=1 // pred_region
      %71 = dma.done [#allocation5], 16
    $region29: #{tpu_custom_call.1} parent=1 // pred_fallthru
      _
    %72 = sfence
    %73 = vsyncpa [#allocation4], 1
    %74 = vsyncpa [#allocation5], 1

</llo_original>
